<compile_context>
chip_gen: v7x
topology: tpu7x:2x2x1
jax: 0.10.0
libtpu: 0.0.40
codegen_flags: <defaults>
</compile_context>

<pallas_src>
import functools

import jax
import jax.numpy as jnp
from jax.experimental import pallas as pl
from jax.experimental.pallas import tpu as pltpu


def _round_up(x, m):
    return (x + m - 1) // m * m


def _bce_partials_kernel(x_ref, y_ref, o_ref, b_acc, p_acc, *,
                         hw, tn, tiles_per_group, ragged):
    """Accumulates per-row (= per-(b, c)) partial sums into VMEM scratch.

    b_acc (BC, 1) f32 : sum_j [ (1 - y) * x + softplus(-x) ]
    p_acc (BC, 1) f32 : sum_j [ y * softplus(-x) ]   (scaled by pos_weight-1 later)
    o_ref (1, BC, 2)  : written once per group, on the last reduction step.
    """
    g = pl.program_id(0)
    n = pl.program_id(1)

    @pl.when(n == 0)
    def _():
        b_acc[...] = jnp.zeros_like(b_acc)
        p_acc[...] = jnp.zeros_like(p_acc)

    # stream at native dtype, upcast in VMEM; keep all math in f32 (v5e-safe).
    x = x_ref[...].astype(jnp.float32)          # (BC, tn)
    y = y_ref[...].astype(jnp.float32)          # (BC, tn)

    sp = jnp.maximum(-x, 0.0) + jnp.log1p(jnp.exp(-jnp.abs(x)))   # softplus(-x), stable
    base = (1.0 - y) * x + sp                   # pos_weight-independent term
    pwterm = y * sp                             # multiplied by (pos_weight - 1) in wrapper

    def _accumulate(b, p):
        b_acc[...] += jnp.sum(b, axis=-1, keepdims=True)
        p_acc[...] += jnp.sum(p, axis=-1, keepdims=True)

    if ragged:
        tile_start = (g * tiles_per_group + n) * tn
        needs_mask = tile_start + tn > hw

        @pl.when(jnp.logical_not(needs_mask))
        def _():
            _accumulate(base, pwterm)

        @pl.when(needs_mask)
        def _():
            # Mask the *outputs* (select-based), so OOB garbage (even NaN/inf) is
            # dropped and softplus(0)=ln2 of a zeroed input can't bias the sums.
            j = jax.lax.broadcasted_iota(jnp.int32, base.shape, dimension=1)
            valid = (j + tile_start) < hw
            _accumulate(jnp.where(valid, base, 0.0),
                        jnp.where(valid, pwterm, 0.0))
    else:
        _accumulate(base, pwterm)

    @pl.when(n == pl.num_programs(1) - 1)
    def _():
        o_ref[0, :, 0:1] = b_acc[...]
        o_ref[0, :, 1:2] = p_acc[...]


def mask_bce_loss(net_output, target, pos_weight=None, *, max_tile_n=131072):
    """Pallas implementation of Mask_BCE_loss.forward.

    net_output: dict with 'low_res_logits' of shape (B, C, H, W) (or the array itself).
                Raw logits — no nonlinearity applied beforehand.
    target:     (B, C, H, W) targets in [0, 1]; may be bf16/int — upcast happens in-kernel.
    pos_weight: scalar or per-class (C,) positive-example weight.
    """
    logits = net_output['low_res_logits'] if isinstance(net_output, dict) else net_output
    B, C, H, W = logits.shape
    assert target.shape == logits.shape
    BC, hw = B * C, H * W

    # free reshapes (contiguous trailing dims); rows = (b, c) pairs on the sublane axis.
    x2 = logits.reshape(BC, hw)
    y2 = target.reshape(BC, hw)

    # --- tiling: large lane-dense tiles, ~4 MiB of f32 work per tile ---------
    # TODO(synk): also tile the row axis if B*C ever gets large enough to blow VMEM.
    hw_lane = _round_up(hw, 128)
    budget_f32_bytes = 4 << 20
    budget_tn = max(128, (budget_f32_bytes // (4 * BC)) // 128 * 128)
    cap_tn = max(128, max_tile_n // 128 * 128)
    tn = min(hw_lane, budget_tn, cap_tn)

    n_tiles = -(-hw // tn)                       # ceil-div, no pad copy
    num_groups = 2 if n_tiles >= 2 else 1        # feeds both v7x TensorCores
    tiles_per_group = -(-n_tiles // num_groups)
    ragged = (num_groups * tiles_per_group * tn) != hw

    # Clamp fully-OOB tile indices (from uneven group split) to the last valid tile;
    # the in-kernel mask (computed from the unclamped start) zeroes their contribution.
    def in_index(g, n):
        return (0, jnp.minimum(g * tiles_per_group + n, n_tiles - 1))

    kernel = functools.partial(
        _bce_partials_kernel, hw=hw, tn=tn,
        tiles_per_group=tiles_per_group, ragged=ragged)

    tile_f32_bytes = BC * tn * 4
    in_tile_bytes = BC * tn * (x2.dtype.itemsize + y2.dtype.itemsize)
    vmem_limit = int(min(48 << 20,               # safe under v7x's 64 MiB physical VMEM
                         max(32 << 20,
                             2 * in_tile_bytes + 6 * tile_f32_bytes + (2 << 20))))

    n_elem = B * C * H * W
    cost = pl.CostEstimate(
        flops=10 * n_elem,
        transcendentals=2 * n_elem,
        bytes_accessed=(x2.size * x2.dtype.itemsize
                        + y2.size * y2.dtype.itemsize
                        + num_groups * BC * 2 * 4))

    partials = pl.pallas_call(
        kernel,
        out_shape=jax.ShapeDtypeStruct((num_groups, BC, 2), jnp.float32),
        grid_spec=pltpu.PrefetchScalarGridSpec(
            num_scalar_prefetch=0,
            grid=(num_groups, tiles_per_group),
            in_specs=[pl.BlockSpec((BC, tn), in_index),    # logits tile
                      pl.BlockSpec((BC, tn), in_index)],   # target tile
            out_specs=pl.BlockSpec((1, BC, 2), lambda g, n: (g, 0, 0)),
            scratch_shapes=[pltpu.VMEM((BC, 1), jnp.float32),
                            pltpu.VMEM((BC, 1), jnp.float32)]),
        compiler_params=pltpu.CompilerParams(
            dimension_semantics=("parallel", "arbitrary"),
            vmem_limit_bytes=vmem_limit),
        cost_estimate=cost,
    )(x2, y2)

    # --- tiny scalar epilogue in JAX: pos_weight combine + global mean -------
    if pos_weight is None:
        pw = jnp.ones((C,), jnp.float32)
    else:
        pw = jnp.broadcast_to(jnp.asarray(pos_weight, jnp.float32).reshape(-1), (C,))

    per_bc = jnp.sum(partials, axis=0).reshape(B, C, 2)    # sum the group partials
    base_total = jnp.sum(per_bc[:, :, 0])
    pw_sums = jnp.sum(per_bc[:, :, 1], axis=0)             # (C,)
    total = base_total + jnp.sum((pw - 1.0) * pw_sums)
    return total / n_elem


def mask_bce_loss_ref(logits, target, pos_weight=None):
    """Pure-JAX reference mirroring torch.nn.BCEWithLogitsLoss(pos_weight=...)."""
    x = logits.astype(jnp.float32)
    y = target.astype(jnp.float32)
    C = x.shape[1]
    if pos_weight is None:
        pw = jnp.ones((C,), jnp.float32)
    else:
        pw = jnp.broadcast_to(jnp.asarray(pos_weight, jnp.float32).reshape(-1), (C,))
    pw = pw.reshape(1, C, 1, 1)
    sp = jax.nn.softplus(-x)
    per_elem = (1.0 - y) * x + (1.0 + (pw - 1.0) * y) * sp
    return jnp.mean(per_elem)


if __name__ == "__main__":
    key = jax.random.PRNGKey(0)
    k1, k2, k3, k4, k5, k6 = jax.random.split(key, 6)

    B, C, H, W = 2, 4, 16, 16
    logits = 3.0 * jax.random.normal(k1, (B, C, H, W), dtype=jnp.float32)
    target = (jax.random.uniform(k2, (B, C, H, W)) > 0.5).astype(jnp.float32)
    pos_weight = jnp.array([1.0, 2.0, 0.5, 3.0], dtype=jnp.float32)
    net_output = {"low_res_logits": logits}

    # f32 logits, per-class pos_weight
    out = jax.block_until_ready(mask_bce_loss(net_output, target, pos_weight))
    ref = mask_bce_loss_ref(logits, target, pos_weight)
    assert jnp.allclose(out, ref, rtol=1e-5, atol=1e-6), (out, ref)

    # default pos_weight (ones)
    out_np = jax.block_until_ready(mask_bce_loss(net_output, target, None))
    ref_np = mask_bce_loss_ref(logits, target, None)
    assert jnp.allclose(out_np, ref_np, rtol=1e-5, atol=1e-6), (out_np, ref_np)

    # bf16 HBM streams (f32 in-kernel math)
    out_bf = jax.block_until_ready(mask_bce_loss(
        {"low_res_logits": logits.astype(jnp.bfloat16)},
        target.astype(jnp.bfloat16), pos_weight))
    ref_bf = mask_bce_loss_ref(logits.astype(jnp.bfloat16),
                               target.astype(jnp.bfloat16), pos_weight)
    assert jnp.allclose(out_bf, ref_bf, rtol=1e-4, atol=1e-5), (out_bf, ref_bf)

    # ragged spatial size -> boundary-block OOB read + select-masked tail (no jnp.pad)
    Hr, Wr = 9, 13
    logits_r = jax.random.normal(k3, (B, C, Hr, Wr), dtype=jnp.float32)
    target_r = (jax.random.uniform(k4, (B, C, Hr, Wr)) > 0.5).astype(jnp.float32)
    out_r = jax.block_until_ready(
        mask_bce_loss({"low_res_logits": logits_r}, target_r, pos_weight))
    ref_r = mask_bce_loss_ref(logits_r, target_r, pos_weight)
    assert jnp.allclose(out_r, ref_r, rtol=1e-5, atol=1e-6), (out_r, ref_r)

    # multi-tile + 2-group split (v7x megacore path) with an odd tile count:
    # hw=527, tn=128 -> 5 tiles -> 2 groups x 3 tiles (one fully-OOB, clamped+masked)
    Hm, Wm = 17, 31
    logits_m = jax.random.normal(k5, (B, C, Hm, Wm), dtype=jnp.float32)
    target_m = (jax.random.uniform(k6, (B, C, Hm, Wm)) > 0.5).astype(jnp.float32)
    out_m = jax.block_until_ready(
        mask_bce_loss({"low_res_logits": logits_m}, target_m, pos_weight, max_tile_n=128))
    ref_m = mask_bce_loss_ref(logits_m, target_m, pos_weight)
    assert jnp.allclose(out_m, ref_m, rtol=1e-5, atol=1e-6), (out_m, ref_m)

    print("KERNEL_OK")
</pallas_src>

<mosaic_0001>
module attributes {stable_mosaic.version = 11 : i64} {
  func.func @_bce_partials_kernel(%arg0: i32, %arg1: i32, %arg2: memref<8x256xf32, #tpu.memory_space<vmem>>, %arg3: memref<8x256xf32, #tpu.memory_space<vmem>>, %arg4: memref<1x8x2xf32, #tpu.memory_space<vmem>>, %arg5: memref<8x1xf32, #tpu.memory_space<vmem>>, %arg6: memref<8x1xf32, #tpu.memory_space<vmem>>) attributes {dimension_semantics = [#tpu.dimension_semantics<parallel>, #tpu.dimension_semantics<arbitrary>], iteration_bounds = array<i64: 1, 1>, scalar_prefetch = 0 : i64, scratch_operands = 2 : i64, tpu.core_type = #tpu.core_type<tc>, window_params = [{transform_indices = @transform_0, window_bounds = array<i64: 8, 256>}, {transform_indices = @transform_1, window_bounds = array<i64: 8, 256>}, {transform_indices = @transform_2, window_bounds = array<i64: 1, 8, 2>}]} {
    %c0_i32 = arith.constant 0 : i32
    %0 = arith.cmpi eq, %arg1, %c0_i32 : i32
    %1 = arith.extui %0 : i1 to i32
    %c0_i32_0 = arith.constant 0 : i32
    %2 = arith.cmpi ne, %1, %c0_i32_0 : i32
    scf.if %2 {
      %cst_19 = arith.constant 0.000000e+00 : f32
      %33 = vector.broadcast %cst_19 : f32 to vector<8x1xf32>
      %c0_20 = arith.constant 0 : index
      %c0_21 = arith.constant 0 : index
      %34 = vector.load %arg5[%c0_20, %c0_21] : memref<8x1xf32, #tpu.memory_space<vmem>>, vector<8x1xf32>
      tpu.vector_store %arg5[%c0_20, %c0_21], %33 {strides = array<i32>} : memref<8x1xf32, #tpu.memory_space<vmem>>, vector<8x1xf32>,
      %cst_22 = arith.constant 0.000000e+00 : f32
      %35 = vector.broadcast %cst_22 : f32 to vector<8x1xf32>
      %c0_23 = arith.constant 0 : index
      %c0_24 = arith.constant 0 : index
      %36 = vector.load %arg6[%c0_23, %c0_24] : memref<8x1xf32, #tpu.memory_space<vmem>>, vector<8x1xf32>
      tpu.vector_store %arg6[%c0_23, %c0_24], %35 {strides = array<i32>} : memref<8x1xf32, #tpu.memory_space<vmem>>, vector<8x1xf32>,
    } else {
    }
    %c0 = arith.constant 0 : index
    %c0_1 = arith.constant 0 : index
    %3 = vector.load %arg2[%c0, %c0_1] : memref<8x256xf32, #tpu.memory_space<vmem>>, vector<8x256xf32>
    %c0_2 = arith.constant 0 : index
    %c0_3 = arith.constant 0 : index
    %4 = vector.load %arg3[%c0_2, %c0_3] : memref<8x256xf32, #tpu.memory_space<vmem>>, vector<8x256xf32>
    %cst = arith.constant 0.000000e+00 : f32
    %5 = vector.broadcast %cst : f32 to vector<8x256xf32>
    %6 = arith.subf %5, %3 : vector<8x256xf32>
    %cst_4 = arith.constant 0.000000e+00 : f32
    %7 = vector.broadcast %cst_4 : f32 to vector<8x256xf32>
    %8 = arith.maximumf %6, %7 : vector<8x256xf32>
    %9 = math.absf %3 : vector<8x256xf32>
    %cst_5 = arith.constant 0.000000e+00 : f32
    %10 = vector.broadcast %cst_5 : f32 to vector<8x256xf32>
    %11 = arith.subf %10, %9 : vector<8x256xf32>
    %12 = math.exp %11 : vector<8x256xf32>
    %13 = math.log1p %12 : vector<8x256xf32>
    %14 = arith.addf %8, %13 : vector<8x256xf32>
    %cst_6 = arith.constant 1.000000e+00 : f32
    %15 = vector.broadcast %cst_6 : f32 to vector<8x256xf32>
    %16 = arith.subf %15, %4 : vector<8x256xf32>
    %17 = arith.mulf %16, %3 : vector<8x256xf32>
    %18 = arith.addf %17, %14 : vector<8x256xf32>
    %19 = arith.mulf %4, %14 : vector<8x256xf32>
    %c0_7 = arith.constant 0 : index
    %c0_8 = arith.constant 0 : index
    %20 = vector.load %arg5[%c0_7, %c0_8] : memref<8x1xf32, #tpu.memory_space<vmem>>, vector<8x1xf32>
    %cst_9 = arith.constant dense<0.000000e+00> : vector<8xf32>
    %21 = vector.multi_reduction <add>, %18, %cst_9 [1] : vector<8x256xf32> to vector<8xf32>
    %22 = vector.shape_cast %21 : vector<8xf32> to vector<8x1xf32>
    %23 = arith.addf %20, %22 : vector<8x1xf32>
    %c0_10 = arith.constant 0 : index
    %c0_11 = arith.constant 0 : index
    %24 = vector.load %arg5[%c0_10, %c0_11] : memref<8x1xf32, #tpu.memory_space<vmem>>, vector<8x1xf32>
    tpu.vector_store %arg5[%c0_10, %c0_11], %23 {strides = array<i32>} : memref<8x1xf32, #tpu.memory_space<vmem>>, vector<8x1xf32>,
    %c0_12 = arith.constant 0 : index
    %c0_13 = arith.constant 0 : index
    %25 = vector.load %arg6[%c0_12, %c0_13] : memref<8x1xf32, #tpu.memory_space<vmem>>, vector<8x1xf32>
    %cst_14 = arith.constant dense<0.000000e+00> : vector<8xf32>
    %26 = vector.multi_reduction <add>, %19, %cst_14 [1] : vector<8x256xf32> to vector<8xf32>
    %27 = vector.shape_cast %26 : vector<8xf32> to vector<8x1xf32>
    %28 = arith.addf %25, %27 : vector<8x1xf32>
    %c0_15 = arith.constant 0 : index
    %c0_16 = arith.constant 0 : index
    %29 = vector.load %arg6[%c0_15, %c0_16] : memref<8x1xf32, #tpu.memory_space<vmem>>, vector<8x1xf32>
    tpu.vector_store %arg6[%c0_15, %c0_16], %28 {strides = array<i32>} : memref<8x1xf32, #tpu.memory_space<vmem>>, vector<8x1xf32>,
    %c0_i32_17 = arith.constant 0 : i32
    %30 = arith.cmpi eq, %arg1, %c0_i32_17 : i32
    %31 = arith.extui %30 : i1 to i32
    %c0_i32_18 = arith.constant 0 : i32
    %32 = arith.cmpi ne, %31, %c0_i32_18 : i32
    scf.if %32 {
      %c0_19 = arith.constant 0 : index
      %c0_20 = arith.constant 0 : index
      %33 = vector.load %arg5[%c0_19, %c0_20] : memref<8x1xf32, #tpu.memory_space<vmem>>, vector<8x1xf32>
      %c0_21 = arith.constant 0 : index
      %c0_22 = arith.constant 0 : index
      %c0_23 = arith.constant 0 : index
      %34 = vector.load %arg4[%c0_21, %c0_22, %c0_23] : memref<1x8x2xf32, #tpu.memory_space<vmem>>, vector<1x8x1xf32>
      %35 = vector.shape_cast %34 : vector<1x8x1xf32> to vector<8x1xf32>
      %36 = vector.shape_cast %33 : vector<8x1xf32> to vector<1x8x1xf32>
      tpu.vector_store %arg4[%c0_21, %c0_22, %c0_23], %36 {strides = array<i32>} : memref<1x8x2xf32, #tpu.memory_space<vmem>>, vector<1x8x1xf32>,
      %c0_24 = arith.constant 0 : index
      %c0_25 = arith.constant 0 : index
      %37 = vector.load %arg6[%c0_24, %c0_25] : memref<8x1xf32, #tpu.memory_space<vmem>>, vector<8x1xf32>
      %c0_26 = arith.constant 0 : index
      %c0_27 = arith.constant 0 : index
      %c1 = arith.constant 1 : index
      %38 = vector.load %arg4[%c0_26, %c0_27, %c1] : memref<1x8x2xf32, #tpu.memory_space<vmem>>, vector<1x8x1xf32>
      %39 = vector.shape_cast %38 : vector<1x8x1xf32> to vector<8x1xf32>
      %40 = vector.shape_cast %37 : vector<8x1xf32> to vector<1x8x1xf32>
      tpu.vector_store %arg4[%c0_26, %c0_27, %c1], %40 {strides = array<i32>} : memref<1x8x2xf32, #tpu.memory_space<vmem>>, vector<1x8x1xf32>,
    } else {
    }
    return
  }
  func.func @transform_0(%arg0: i32, %arg1: i32) -> (i32, i32) {
    %c1_i32 = arith.constant 1 : i32
    %0 = arith.muli %arg0, %c1_i32 : i32
    %1 = arith.addi %0, %arg1 : i32
    %c0_i32 = arith.constant 0 : i32
    %2 = arith.minsi %1, %c0_i32 : i32
    %c0_i32_0 = arith.constant 0 : i32
    %c0_i32_1 = arith.constant 0 : i32
    return %c0_i32_0, %2 : i32, i32
  }
  func.func @transform_1(%arg0: i32, %arg1: i32) -> (i32, i32) {
    %c1_i32 = arith.constant 1 : i32
    %0 = arith.muli %arg0, %c1_i32 : i32
    %1 = arith.addi %0, %arg1 : i32
    %c0_i32 = arith.constant 0 : i32
    %2 = arith.minsi %1, %c0_i32 : i32
    %c0_i32_0 = arith.constant 0 : i32
    %c0_i32_1 = arith.constant 0 : i32
    return %c0_i32_0, %2 : i32, i32
  }
  func.func @transform_2(%arg0: i32, %arg1: i32) -> (i32, i32, i32) {
    %c0_i32 = arith.constant 0 : i32
    %c0_i32_0 = arith.constant 0 : i32
    %c0_i32_1 = arith.constant 0 : i32
    return %arg0, %c0_i32, %c0_i32_0 : i32, i32, i32
  }
}

</mosaic_0001>

<llo_original>
// kernel: tpu_custom_call.1
$region0: #{tpu_custom_call.1}
  #allocation0 [shape = 'u32[]', space=smem, size = 0x4, offset = 0x4, fixed_abs, tag = 'smem constant byte address 0x4 - core index']
  #allocation1 [shape = 'u32[144,128]{1,0:T(1,128)}', space=vmem, size = 0x12000, scoped, tag = 'internal scratch']
  #allocation2 [shape = 'f32[8,1]{1,0:T(8,128)}', space=vmem, size = 0x1000, scoped, tag = 'scratch operand']
  #allocation3 [shape = 'f32[8,1]{1,0:T(8,128)}', space=vmem, size = 0x1000, scoped, tag = 'scratch operand']
  %s0 = inlined_call_operand.hbm [shape: f32[8,256], index: 0, kind: input, shape index: {}]
  %s1 = inlined_call_operand.hbm [shape: f32[8,256], index: 1, kind: input, shape index: {}]
  %s2 = inlined_call_operand.vmem [shape: f32[1,8,2], index: 2, kind: output, shape index: {}]
  %s3 = sld [smem:[#allocation0]]
  $region34: #{tpu_custom_call.1} parent=0
    _
  %s5 = ssub.s32 1, %s3
  %s6 = scalar_select 0, %s5, %s3
  $region1: #{tpu_custom_call.1} parent=0
    #allocation4 [shape = 'u8[8192]{0}', space=vmem, size = 0x2000, scoped, tag = 'input window, operand 0, single buffered']
    #allocation5 [shape = 's32[1]{0}', space=sflag, size = 0x4, scoped, tag = 'scoped memory for tpu_custom_call.1']
    #allocation6 [shape = 'u8[8192]{0}', space=vmem, size = 0x2000, scoped, tag = 'input window, operand 1, single buffered']
    #allocation7 [shape = 's32[1]{0}', space=sflag, size = 0x4, scoped, tag = 'scoped memory for tpu_custom_call.1']
    %7 = vsyncpa [#allocation5], 0
    %8 = vsyncpa [#allocation7], 0
    // Predicated region
    $region2: #{tpu_custom_call.1} parent=1 // pred_check
      _
    $region3: #{tpu_custom_call.1} parent=1 // pred_check_branch
      %10 = sbr.rel (0) target = $region5
    $region4: #{tpu_custom_call.1} parent=1 // pred_region
      %s11 = sadd.s32 0, 0
      %p12 = scmp.lt.s32.totalorder %s11, 0
      %s13 = scalar_select %p12, %s11, 0
      %s14 = smul.u32 2, %s13
      %s16 = ssub.s32 256, 256
      %17 = vsyncadd [#allocation5], %s16
      %s18 = smul.addr %s14, 128
      %s19 = scalar_lea.hbm %s0, %s18
      %s21 = sshll.u32 [#allocation4], 4
      %s22 = int_to_ptr.vmem [resolvable:$true] %s21
      %24 = dma.hbm_to_vmem [thread:$0]  %s19, 256, %s22, [#allocation5]
    $region5: #{tpu_custom_call.1} parent=1 // pred_fallthru
      _
    // Predicated region
    $region6: #{tpu_custom_call.1} parent=1 // pred_check
      _
    $region7: #{tpu_custom_call.1} parent=1 // pred_check_branch
      %26 = sbr.rel (0) target = $region9
    $region8: #{tpu_custom_call.1} parent=1 // pred_region
      %s27 = sadd.s32 0, 0
      %p28 = scmp.lt.s32.totalorder %s27, 0
      %s29 = scalar_select %p28, %s27, 0
      %s30 = smul.u32 2, %s29
      %s32 = ssub.s32 256, 256
      %33 = vsyncadd [#allocation7], %s32
      %s34 = smul.addr %s30, 128
      %s35 = scalar_lea.hbm %s1, %s34
      %s37 = sshll.u32 [#allocation6], 4
      %s38 = int_to_ptr.vmem [resolvable:$true] %s37
      %40 = dma.hbm_to_vmem [thread:$0]  %s35, 256, %s38, [#allocation7]
    $region9: #{tpu_custom_call.1} parent=1 // pred_fallthru
      _
    // Predicated region
    $region10: #{tpu_custom_call.1} parent=1 // pred_check
      _
    $region11: #{tpu_custom_call.1} parent=1 // pred_check_branch
      %42 = sbr.rel (0) target = $region13
    $region12: #{tpu_custom_call.1} parent=1 // pred_region
      %43 = dma.done [#allocation5], 256
    $region13: #{tpu_custom_call.1} parent=1 // pred_fallthru
      _
    // Predicated region
    $region14: #{tpu_custom_call.1} parent=1 // pred_check
      _
    $region15: #{tpu_custom_call.1} parent=1 // pred_check_branch
      %45 = sbr.rel (0) target = $region17
    $region16: #{tpu_custom_call.1} parent=1 // pred_region
      %46 = dma.done [#allocation7], 256
    $region17: #{tpu_custom_call.1} parent=1 // pred_fallthru
      _
    %s47 = sadd.s32 0, 0
    %p48 = scmp.lt.s32.totalorder %s47, 0
    %s49 = scalar_select %p48, %s47, 0
    %s50 = smul.u32 2, %s49
    %s51 = sadd.s32 0, 0
    %p52 = scmp.lt.s32.totalorder %s51, 0
    %s53 = scalar_select %p52, %s51, 0
    %s54 = smul.u32 2, %s53
    %p55 = scmp.eq.s32.totalorder 0, 0
    // Predicated region
    $region18: #{tpu_custom_call.1} parent=1 // pred_check
      %p56 = pneg %p55
    $region19: #{tpu_custom_call.1} parent=1 // pred_check_branch
      %58 = sbr.rel (%p56) target = $region21
    $region20: #{tpu_custom_call.1} parent=1 // pred_region
      %vm59 = vcmask 7168
      %60 = vst.msk [vmem:[#allocation2] sm:$0xff] %vm59, 0.0
      %61 = vst.msk [vmem:[#allocation3] sm:$0xff] %vm59, 0.0
    $region21: #{tpu_custom_call.1} parent=1 // pred_fallthru
      _
    %v62 = vld [vmem:[#allocation4] sm:$0xff]
    %v63 = vld [vmem:[#allocation4 + $0x8] sm:$0xff]
    %v64 = vld [vmem:[#allocation6] sm:$0xff]
    %v65 = vld [vmem:[#allocation6 + $0x8] sm:$0xff]
    %v66 = vsub.f32 0.0, %v62
    %v67 = vsub.f32 0.0, %v63
    %v68 = vmax.f32 %v66, 0.0
    %v69 = vmax.f32 %v67, 0.0
    %v70 = vand.u32 2147483647, %v62
    %v71 = vand.u32 2147483647, %v63
    %v72 = vsub.f32 0.0, %v70
    %v73 = vsub.f32 0.0, %v71
    %v74 = vmul.f32 %v72, 1.442695
    %v75 = vpow.pop %v74
    %v76 = vmul.f32 %v73, 1.442695
    %v77 = vpow.pop %v76
    %v78 = vadd.f32 %v75, 1.0
    %v79 = vlog2.pop %v78
    %v80 = vmul.f32 %v79, 0.6931472
    %v81 = vmul.f32 -0.5, %v75
    %v82 = vadd.f32 %v81, 1.0
    %v83 = vmul.f32 %v82, %v75
    %v84 = vand.u32 2147483647, %v75
    %vm85 = vcmp.lt.f32.partialorder %v84, 0.0004427343
    %v86 = vsel %vm85, %v83, %v80
    %v87 = vadd.f32 %v77, 1.0
    %v88 = vlog2.pop %v87
    %v89 = vmul.f32 %v88, 0.6931472
    %v90 = vmul.f32 -0.5, %v77
    %v91 = vadd.f32 %v90, 1.0
    %v92 = vmul.f32 %v91, %v77
    %v93 = vand.u32 2147483647, %v77
    %vm94 = vcmp.lt.f32.partialorder %v93, 0.0004427343
    %v95 = vsel %vm94, %v92, %v89
    %v96 = vadd.f32 %v68, %v86
    %v97 = vadd.f32 %v69, %v95
    %v98 = vsub.f32 1.0, %v64
    %v99 = vsub.f32 1.0, %v65
    %v100 = vmul.f32 %v98, %v62
    %v101 = vmul.f32 %v99, %v63
    %v102 = vadd.f32 %v100, %v96
    %v103 = vadd.f32 %v101, %v97
    %v104 = vmul.f32 %v64, %v96
    %v105 = vmul.f32 %v65, %v97
    %v106 = vld [vmem:[#allocation2] sm:$0xff]
    %v107 = vadd.f32 %v102, %v103
    %108 = vadd.xlane.f32.xlu0 %v107
    %v109 = vpop.xlane.xlu0 %108
    %v110 = vadd.f32 %v106, %v109
    %vm111 = vcmask 7168
    %112 = vst.msk [vmem:[#allocation2] sm:$0xff] %vm111, %v110
    %v113 = vld [vmem:[#allocation3] sm:$0xff]
    %v114 = vadd.f32 %v104, %v105
    %115 = vadd.xlane.f32.xlu0 %v114
    %v116 = vpop.xlane.xlu0 %115
    %v117 = vadd.f32 %v113, %v116
    %118 = vst.msk [vmem:[#allocation3] sm:$0xff] %vm111, %v117
    // Predicated region
    $region22: #{tpu_custom_call.1} parent=1 // pred_check
      %p119 = pneg %p55
    $region23: #{tpu_custom_call.1} parent=1 // pred_check_branch
      %121 = sbr.rel (%p119) target = $region25
    $region24: #{tpu_custom_call.1} parent=1 // pred_region
      %v122 = vld [vmem:[#allocation2] sm:$0xff]
      %123 = vst.msk [vmem:[%s2] sm:$0xff] %vm111, %v122
      %v124 = vld [vmem:[#allocation3] sm:$0xff]
      %126 = vrot.lane.b32.xlu0 %v124, 1
      %v127 = vpop.permute.xlu0 %126
      %vm129 = vcmask 15368
      %130 = vst.msk [vmem:[%s2] sm:$0xff] %vm129, %v127
    $region25: #{tpu_custom_call.1} parent=1 // pred_fallthru
      _
    // Predicated region
    $region26: #{tpu_custom_call.1} parent=1 // pred_check
      _
    $region27: #{tpu_custom_call.1} parent=1 // pred_check_branch
      %132 = sbr.rel (0) target = $region29
    $region28: #{tpu_custom_call.1} parent=1 // pred_region
      _
    $region29: #{tpu_custom_call.1} parent=1 // pred_fallthru
      _
    // Predicated region
    $region30: #{tpu_custom_call.1} parent=1 // pred_check
      _
    $region31: #{tpu_custom_call.1} parent=1 // pred_check_branch
      %134 = sbr.rel (0) target = $region33
    $region32: #{tpu_custom_call.1} parent=1 // pred_region
      _
    $region33: #{tpu_custom_call.1} parent=1 // pred_fallthru
      _
    %135 = vsyncpa [#allocation5], 1
    %136 = vsyncpa [#allocation7], 1

</llo_original>
